<compile_context>
chip_gen: v7x
topology: tpu7x:2x2x1
jax: 0.10.0
libtpu: 0.0.40
codegen_flags: <defaults>
</compile_context>

<pallas_src>
import functools

import jax
import jax.numpy as jnp
from jax.experimental import pallas as pl
from jax.experimental.pallas import tpu as pltpu


def _shortcut_kernel(sel_ref, x_ref, o_ref, *, pad):
    # sel_ref: (H*W, H_out*W_out)      constant 0/1 joint stride-2 selection
    # x_ref:   (B, C, H*W)             B whole images, spatial flattened (lane-dense)
    # o_ref:   (B, C_out, H_out*W_out) B whole outputs, spatial flattened
    B, C, P = x_ref.shape
    _, C_out, Q = o_ref.shape

    # Joint (H, W) stride-2 subsample as a single exact 0/1 selection matmul on
    # the MXU.  Only leading dims are collapsed (lane dim untouched), so the
    # reshape is layout-preserving for the ResNet-CIFAR channel counts (C % 8 == 0).
    x2 = x_ref[...].reshape(B * C, P)
    xs = jnp.dot(x2, sel_ref[...], preferred_element_type=jnp.float32)
    xs = xs.reshape(B, C, Q).astype(o_ref.dtype)

    # Zero only the channel-pad slabs; store the real-channel centre once.
    if pad > 0:
        o_ref[:, :pad, :] = jnp.zeros((B, pad, Q), dtype=o_ref.dtype)
    tail = C_out - pad - C
    if tail > 0:
        o_ref[:, pad + C:, :] = jnp.zeros((B, tail, Q), dtype=o_ref.dtype)
    o_ref[:, pad:pad + C, :] = xs


def _pick_block_batch(n, per_image_bytes, target_bytes=1 << 20):
    """Largest divisor of n that (a) gives ~target_bytes of traffic per grid
    step and (b) keeps >= 2 grid blocks when n >= 2 (so both v7x TensorCores
    get work).  Small blocks keep VMEM use tiny on every generation."""
    want = max(1, min(n, target_bytes // max(per_image_bytes, 1)))
    if n >= 2:
        want = min(want, n // 2)          # at least 2 grid blocks
    want = max(want, 1)
    for b in range(want, 0, -1):
        if n % b == 0:
            return b
    return 1


def lambda_layer_shortcut(x_nchw, planes):
    """Pallas TPU implementation of
        lambda x: F.pad(x[:, :, ::2, ::2],
                        (0, 0, 0, 0, planes // 4, planes // 4), 'constant', 0)
    Input / output are NCHW (PyTorch convention)."""
    N, C, H, W = x_nchw.shape
    pad = planes // 4
    H_out = -(-H // 2)                    # ceil: matches x[:, :, ::2, ::2]
    W_out = -(-W // 2)
    C_out = C + 2 * pad
    P = H * W
    Q = H_out * W_out

    # Constant joint stride-2 selection matrix:
    #   sel[p, q] = 1  iff  p == (2*qh)*W + 2*qw  with  q = qh*W_out + qw.
    # Built once at trace time; DMA'd once and kept VMEM-resident in the kernel.
    p_idx = jnp.arange(P, dtype=jnp.int32)
    q_idx = jnp.arange(Q, dtype=jnp.int32)
    src_h = (p_idx // W)[:, None]
    src_w = (p_idx % W)[:, None]
    dst_h = (q_idx // W_out)[None, :]
    dst_w = (q_idx % W_out)[None, :]
    sel = ((src_h == 2 * dst_h) & (src_w == 2 * dst_w)).astype(x_nchw.dtype)

    # Flatten spatial axes so input/output are lane-dense; these reshapes are
    # metadata-only for contiguous NCHW tensors.
    x_flat = x_nchw.reshape(N, C, P)

    per_image_bytes = (C * P + C_out * Q) * x_nchw.dtype.itemsize
    B = _pick_block_batch(N, per_image_bytes)
    grid = (N // B,)

    kernel = functools.partial(_shortcut_kernel, pad=pad)
    out_flat = pl.pallas_call(
        kernel,
        out_shape=jax.ShapeDtypeStruct((N, C_out, Q), x_nchw.dtype),
        grid=grid,
        in_specs=[
            pl.BlockSpec((P, Q), lambda n: (0, 0)),        # sel: constant, stays resident
            pl.BlockSpec((B, C, P), lambda n: (n, 0, 0)),  # B images per step
        ],
        out_specs=pl.BlockSpec((B, C_out, Q), lambda n: (n, 0, 0)),
        compiler_params=pltpu.CompilerParams(
            dimension_semantics=("parallel",)),
    )(sel, x_flat)

    # Metadata-only split of the flattened spatial axis back to (H_out, W_out).
    return out_flat.reshape(N, C_out, H_out, W_out)


def _reference(x_nchw, planes):
    pad = planes // 4
    xs = x_nchw[:, :, ::2, ::2]
    return jnp.pad(xs, ((0, 0), (pad, pad), (0, 0), (0, 0)))


if __name__ == "__main__":
    key = jax.random.PRNGKey(0)
    # Small but realistic ResNet-CIFAR transition: N=4, C=16, H=W=16, planes=32 (pad=8).
    # N=4 -> B=2, grid=(2,): exercises multi-image blocks and >=2 parallel blocks.
    x = jax.random.normal(key, (4, 16, 16, 16), dtype=jnp.float32)   # NCHW
    planes = 32

    out = jax.jit(lambda_layer_shortcut, static_argnums=1)(x, planes)
    out = jax.block_until_ready(out)

    ref = _reference(x, planes)
    assert out.shape == ref.shape == (4, 32, 8, 8), out.shape
    assert jnp.allclose(out, ref), "mismatch vs reference"
    print("KERNEL_OK")
</pallas_src>

<mosaic_0001>
module attributes {stable_mosaic.version = 11 : i64} {
  func.func @_shortcut_kernel(%arg0: i32, %arg1: memref<256x64xf32, #tpu.memory_space<vmem>>, %arg2: memref<2x16x256xf32, #tpu.memory_space<vmem>>, %arg3: memref<2x32x64xf32, #tpu.memory_space<vmem>>) attributes {dimension_semantics = [#tpu.dimension_semantics<parallel>], iteration_bounds = array<i64: 2>, scalar_prefetch = 0 : i64, scratch_operands = 0 : i64, tpu.core_type = #tpu.core_type<tc>, window_params = [{pipeline_mode = #tpu.pipeline_mode<synchronous>, transform_indices = @transform_0, window_bounds = array<i64: 256, 64>}, {transform_indices = @transform_1, window_bounds = array<i64: 2, 16, 256>}, {transform_indices = @transform_2, window_bounds = array<i64: 2, 32, 64>}]} {
    %c0 = arith.constant 0 : index
    %c0_0 = arith.constant 0 : index
    %c0_1 = arith.constant 0 : index
    %0 = vector.load %arg2[%c0, %c0_0, %c0_1] : memref<2x16x256xf32, #tpu.memory_space<vmem>>, vector<2x16x256xf32>
    %1 = vector.shape_cast %0 : vector<2x16x256xf32> to vector<32x256xf32>
    %c0_2 = arith.constant 0 : index
    %c0_3 = arith.constant 0 : index
    %2 = vector.load %arg1[%c0_2, %c0_3] : memref<256x64xf32, #tpu.memory_space<vmem>>, vector<256x64xf32>
    %cst = arith.constant dense<0.000000e+00> : vector<32x64xf32>
    %3 = tpu.matmul %1, %2, %cst {dimension_numbers = #tpu.dot_dimension_numbers<[1], [0], [0], [1], [0, 0, 1, 1], [], []>} : vector<32x256xf32>, vector<256x64xf32>, vector<32x64xf32> -> vector<32x64xf32>
    %4 = vector.shape_cast %3 : vector<32x64xf32> to vector<2x16x64xf32>
    %cst_4 = arith.constant 0.000000e+00 : f32
    %5 = vector.broadcast %cst_4 : f32 to vector<2x8x64xf32>
    %c0_5 = arith.constant 0 : index
    %c0_6 = arith.constant 0 : index
    %c0_7 = arith.constant 0 : index
    %6 = vector.load %arg3[%c0_5, %c0_6, %c0_7] : memref<2x32x64xf32, #tpu.memory_space<vmem>>, vector<2x8x64xf32>
    tpu.vector_store %arg3[%c0_5, %c0_6, %c0_7], %5 {strides = array<i32>} : memref<2x32x64xf32, #tpu.memory_space<vmem>>, vector<2x8x64xf32>,
    %cst_8 = arith.constant 0.000000e+00 : f32
    %7 = vector.broadcast %cst_8 : f32 to vector<2x8x64xf32>
    %c0_9 = arith.constant 0 : index
    %c24 = arith.constant 24 : index
    %c0_10 = arith.constant 0 : index
    %8 = vector.load %arg3[%c0_9, %c24, %c0_10] : memref<2x32x64xf32, #tpu.memory_space<vmem>>, vector<2x8x64xf32>
    tpu.vector_store %arg3[%c0_9, %c24, %c0_10], %7 {strides = array<i32>} : memref<2x32x64xf32, #tpu.memory_space<vmem>>, vector<2x8x64xf32>,
    %c0_11 = arith.constant 0 : index
    %c8 = arith.constant 8 : index
    %c0_12 = arith.constant 0 : index
    %9 = vector.load %arg3[%c0_11, %c8, %c0_12] : memref<2x32x64xf32, #tpu.memory_space<vmem>>, vector<2x16x64xf32>
    tpu.vector_store %arg3[%c0_11, %c8, %c0_12], %4 {strides = array<i32>} : memref<2x32x64xf32, #tpu.memory_space<vmem>>, vector<2x16x64xf32>,
    return
  }
  func.func @transform_0(%arg0: i32) -> (i32, i32) {
    %c0_i32 = arith.constant 0 : i32
    %c0_i32_0 = arith.constant 0 : i32
    %c0_i32_1 = arith.constant 0 : i32
    return %c0_i32, %c0_i32_0 : i32, i32
  }
  func.func @transform_1(%arg0: i32) -> (i32, i32, i32) {
    %c0_i32 = arith.constant 0 : i32
    %c0_i32_0 = arith.constant 0 : i32
    %c0_i32_1 = arith.constant 0 : i32
    return %arg0, %c0_i32, %c0_i32_0 : i32, i32, i32
  }
  func.func @transform_2(%arg0: i32) -> (i32, i32, i32) {
    %c0_i32 = arith.constant 0 : i32
    %c0_i32_0 = arith.constant 0 : i32
    %c0_i32_1 = arith.constant 0 : i32
    return %arg0, %c0_i32, %c0_i32_0 : i32, i32, i32
  }
}

</mosaic_0001>

<llo_original>
// kernel: lambda_layer_shortcut.1
$region0: #{lambda_layer_shortcut.1}
  #allocation0 [shape = 'u32[]', space=smem, size = 0x4, offset = 0x4, fixed_abs, tag = 'smem constant byte address 0x4 - core index']
  #allocation1 [shape = 'u32[144,128]{1,0:T(1,128)}', space=vmem, size = 0x12000, scoped, tag = 'internal scratch']
  %s0 = inlined_call_operand.vmem [shape: f32[256,64], index: 0, kind: input, shape index: {}]
  %s1 = inlined_call_operand.vmem [shape: f32[4,16,256], index: 1, kind: input, shape index: {}]
  %s2 = inlined_call_operand.vmem [shape: f32[4,32,64], index: 2, kind: output, shape index: {}]
  %s3 = sld [smem:[#allocation0]]
  $region41: #{lambda_layer_shortcut.1} parent=0
    _
  %s5 = ssub.s32 1, %s3
  %s6 = scalar_select 0, %s5, %s3
  loop: start=0, step=1, limit=4
  $region2: #{lambda_layer_shortcut.1} parent=0 // loop_pre_header
    _
  $region3: #{lambda_layer_shortcut.1} parent=0 // loop_header
    %s8 = sphi 0, %s12
    %p9 = scmp.ge.s32.totalorder %s8, 4
    %s16 = sphi 0, %s16
    %s18 = sphi 0, %s16
    %s19 = sphi 0, %s18
    %s33 = sphi 0, %s19
    %s39 = sphi 0, %s41
    %s42 = sphi 0, %s39
    %s43 = sphi 0, %s42
    %s59 = sphi 0, %s43
    %s65 = sphi 0, %s67
    %s68 = sphi 0, %s65
    %s69 = sphi 0, %s68
    %s85 = sphi 0, %s69
  $region4: #{lambda_layer_shortcut.1} parent=0 // loop_header_branch
    %11 = sbr.rel (%p9) target = $region8
  $region5: #{lambda_layer_shortcut.1} parent=0 // loop_body
    %s13 = ssub.s32 %s8, 1
    %s14 = ssub.s32 %s8, 2
    %s15 = sadd.s32 %s8, 1
    %s17 = sadd.s32 %s16, 1
    %p20 = scmp.eq.s32.totalorder %s8, 1
    %p21 = scmp.ne.s32.totalorder %s16, %s18
    %p22 = scmp.eq.s32.totalorder %s8, 0
    %p23 = por %p21, %p22
    %p24 = scmp.ne.s32.totalorder %s16, %s18
    %p25 = scmp.eq.s32.totalorder %s13, 1
    %p26 = por %p24, %p25
    %p27 = scmp.ne.s32.totalorder %s18, %s19
    %p28 = scmp.eq.s32.totalorder %s13, 0
    %p29 = por %p27, %p28
    %p30 = scmp.ne.s32.totalorder %s18, %s19
    %p31 = scmp.eq.s32.totalorder %s14, 1
    %p32 = por %p30, %p31
    %p34 = scmp.ne.s32.totalorder %s19, %s33
    %p35 = scmp.eq.s32.totalorder %s14, 0
    %p36 = por %p34, %p35
    %s37 = ssub.s32 %s8, %s15
    %p38 = scmp.eq.s32.totalorder %s37, 0
    %s40 = sadd.s32 %s39, 1
    %s41 = scalar_select %p38, %s39, %s40
    %p44 = pneg %p38
    %p45 = scmp.eq.s32.totalorder %s8, 1
    %p46 = por %p44, %p45
    %p47 = scmp.ne.s32.totalorder %s39, %s42
    %p48 = scmp.eq.s32.totalorder %s8, 0
    %p49 = por %p47, %p48
    %p50 = scmp.ne.s32.totalorder %s39, %s42
    %p51 = scmp.eq.s32.totalorder %s13, 1
    %p52 = por %p50, %p51
    %p53 = scmp.ne.s32.totalorder %s42, %s43
    %p54 = scmp.eq.s32.totalorder %s13, 0
    %p55 = por %p53, %p54
    %p56 = scmp.ne.s32.totalorder %s42, %s43
    %p57 = scmp.eq.s32.totalorder %s14, 1
    %p58 = por %p56, %p57
    %p60 = scmp.ne.s32.totalorder %s43, %s59
    %p61 = scmp.eq.s32.totalorder %s14, 0
    %p62 = por %p60, %p61
    %s63 = ssub.s32 %s8, %s15
    %p64 = scmp.eq.s32.totalorder %s63, 0
    %s66 = sadd.s32 %s65, 1
    %s67 = scalar_select %p64, %s65, %s66
    %p70 = pneg %p64
    %p71 = scmp.eq.s32.totalorder %s8, 1
    %p72 = por %p70, %p71
    %p73 = scmp.ne.s32.totalorder %s65, %s68
    %p74 = scmp.eq.s32.totalorder %s8, 0
    %p75 = por %p73, %p74
    %p76 = scmp.ne.s32.totalorder %s65, %s68
    %p77 = scmp.eq.s32.totalorder %s13, 1
    %p78 = por %p76, %p77
    %p79 = scmp.ne.s32.totalorder %s68, %s69
    %p80 = scmp.eq.s32.totalorder %s13, 0
    %p81 = por %p79, %p80
    %p82 = scmp.ne.s32.totalorder %s68, %s69
    %p83 = scmp.eq.s32.totalorder %s14, 1
    %p84 = por %p82, %p83
    %p86 = scmp.ne.s32.totalorder %s69, %s85
    %p87 = scmp.eq.s32.totalorder %s14, 0
    %p88 = por %p86, %p87
    %p89 = scmp.le.s32.totalorder 1, %s8
    %p90 = scmp.lt.s32.totalorder %s8, 3
    %p91 = pnand %p89, %p90
    %p92 = pneg %p91
    // Predicated region
    $region9: #{lambda_layer_shortcut.1} parent=5 // pred_check
      _
    $region10: #{lambda_layer_shortcut.1} parent=5 // pred_check_branch
      %94 = sbr.rel (%p91) target = $region12
    $region11: #{lambda_layer_shortcut.1} parent=5 // pred_region
      %s95 = ssub.s32 %s8, 1
      // Predicated region
      $region13: #{lambda_layer_shortcut.1} parent=11 // pred_check
        %p96 = pneg %p29
      $region14: #{lambda_layer_shortcut.1} parent=11 // pred_check_branch
        %98 = sbr.rel (%p96) target = $region16
      $region15: #{lambda_layer_shortcut.1} parent=11 // pred_region
        _
      $region16: #{lambda_layer_shortcut.1} parent=11 // pred_fallthru
        _
    $region12: #{lambda_layer_shortcut.1} parent=5 // pred_fallthru
      _
    %p99 = scmp.lt.s32.totalorder %s8, 2
    // Predicated region
    $region17: #{lambda_layer_shortcut.1} parent=5 // pred_check
      %p100 = pneg %p99
    $region18: #{lambda_layer_shortcut.1} parent=5 // pred_check_branch
      %102 = sbr.rel (%p100) target = $region20
    $region19: #{lambda_layer_shortcut.1} parent=5 // pred_region
      // Predicated region
      $region21: #{lambda_layer_shortcut.1} parent=19 // pred_check
        %p103 = pneg %p49
      $region22: #{lambda_layer_shortcut.1} parent=19 // pred_check_branch
        %105 = sbr.rel (%p103) target = $region24
      $region23: #{lambda_layer_shortcut.1} parent=19 // pred_region
        %s106 = smul.u32 2, %s8
        %p107 = scmp.lt.s32.totalorder %s106, 3
        %s108 = scalar_select %p107, %s106, 3
        %s109 = smul.addr %s108, 4
        %s110 = smul.addr %s109, 8
        %s111 = scalar_lea.vmem %s1, %s110
        %s112 = smul.u32 2, %s8
      $region24: #{lambda_layer_shortcut.1} parent=19 // pred_fallthru
        _
    $region20: #{lambda_layer_shortcut.1} parent=5 // pred_fallthru
      _
    %p113 = scmp.le.s32.totalorder 1, %s8
    %p114 = scmp.lt.s32.totalorder %s8, 3
    %p115 = pnand %p113, %p114
    %p116 = pneg %p115
    // Predicated region
    $region25: #{lambda_layer_shortcut.1} parent=5 // pred_check
      _
    $region26: #{lambda_layer_shortcut.1} parent=5 // pred_check_branch
      %118 = sbr.rel (%p115) target = $region28
    $region27: #{lambda_layer_shortcut.1} parent=5 // pred_region
      %s119 = ssub.s32 %s8, 1
      %p120 = pneg %p29
      %p121 = pneg %p26
      %s122 = smul.u32 2, %s13
      %p123 = scmp.lt.s32.totalorder %s122, 3
      %s124 = scalar_select %p123, %s122, 3
      %s125 = smul.addr %s124, 4
      %s126 = smul.addr %s125, 8
      %s127 = scalar_lea.vmem %s1, %s126
      %p128 = pneg %p55
      %p129 = pneg %p52
      %p130 = pneg %p81
      %p131 = pneg %p78
      %s132 = smul.u32 2, %s13
      %p133 = scmp.lt.s32.totalorder %s132, 3
      %s134 = scalar_select %p133, %s132, 3
      %s135 = smul.addr %s134, 4
      %s136 = smul.addr %s135, 8
      %s137 = scalar_lea.vmem %s2, %s136
      %s138 = smul.u32 2, %s13
      %p139 = scmp.lt.s32.totalorder %s138, 3
      %s140 = scalar_select %p139, %s138, 3
      %s141 = smul.addr %s140, 4
      %s142 = smul.addr %s141, 8
      %s143 = scalar_lea.vmem %s1, %s142
      %s144 = smul.u32 2, %s13
      %s145 = smul.u32 2, %s13
      %p146 = scmp.lt.s32.totalorder %s145, 3
      %s147 = scalar_select %p146, %s145, 3
      %s148 = smul.addr %s147, 4
      %s149 = smul.addr %s148, 8
      %s150 = scalar_lea.vmem %s2, %s149
      %s151 = smul.u32 2, %s13
      %v152 = vld [vmem:[%s143] sm:$0xff]
      %v153 = vld [vmem:[%s143 + $0x8] sm:$0xff]
      %v154 = vld [vmem:[%s143 + $0x10] sm:$0xff]
      %v155 = vld [vmem:[%s143 + $0x18] sm:$0xff]
      %v156 = vld [vmem:[%s143 + $0x20] sm:$0xff]
      %v157 = vld [vmem:[%s143 + $0x28] sm:$0xff]
      %v158 = vld [vmem:[%s143 + $0x30] sm:$0xff]
      %v159 = vld [vmem:[%s143 + $0x38] sm:$0xff]
      %v160 = vld [vmem:[%s0] sm:$0xff]
      %v161 = vld [vmem:[%s0 + $0x8] sm:$0xff]
      %v162 = vld [vmem:[%s0 + $0x10] sm:$0xff]
      %v163 = vld [vmem:[%s0 + $0x18] sm:$0xff]
      %v164 = vld [vmem:[%s0 + $0x20] sm:$0xff]
      %v165 = vld [vmem:[%s0 + $0x28] sm:$0xff]
      %v166 = vld [vmem:[%s0 + $0x30] sm:$0xff]
      %v167 = vld [vmem:[%s0 + $0x38] sm:$0xff]
      %v168 = vld [vmem:[%s0 + $0x40] sm:$0xff]
      %v169 = vld [vmem:[%s0 + $0x48] sm:$0xff]
      %v170 = vld [vmem:[%s0 + $0x50] sm:$0xff]
      %v171 = vld [vmem:[%s0 + $0x58] sm:$0xff]
      %v172 = vld [vmem:[%s0 + $0x60] sm:$0xff]
      %v173 = vld [vmem:[%s0 + $0x68] sm:$0xff]
      %v174 = vld [vmem:[%s0 + $0x70] sm:$0xff]
      %v175 = vld [vmem:[%s0 + $0x78] sm:$0xff]
      %v176 = vld [vmem:[%s0 + $0x80] sm:$0xff]
      %v177 = vld [vmem:[%s0 + $0x88] sm:$0xff]
      %v178 = vld [vmem:[%s0 + $0x90] sm:$0xff]
      %v179 = vld [vmem:[%s0 + $0x98] sm:$0xff]
      %v180 = vld [vmem:[%s0 + $0xa0] sm:$0xff]
      %v181 = vld [vmem:[%s0 + $0xa8] sm:$0xff]
      %v182 = vld [vmem:[%s0 + $0xb0] sm:$0xff]
      %v183 = vld [vmem:[%s0 + $0xb8] sm:$0xff]
      %v184 = vld [vmem:[%s0 + $0xc0] sm:$0xff]
      %v185 = vld [vmem:[%s0 + $0xc8] sm:$0xff]
      %v186 = vld [vmem:[%s0 + $0xd0] sm:$0xff]
      %v187 = vld [vmem:[%s0 + $0xd8] sm:$0xff]
      %v188 = vld [vmem:[%s0 + $0xe0] sm:$0xff]
      %v189 = vld [vmem:[%s0 + $0xe8] sm:$0xff]
      %v190 = vld [vmem:[%s0 + $0xf0] sm:$0xff]
      %v191 = vld [vmem:[%s0 + $0xf8] sm:$0xff]
      %192 = vmatprep.subr.mxu0 0.0
      %193 = vmatpush1.msra.mxu0 %v160
      %194 = vmatprep.subr.mxu0 0.0
      %195 = vmatpush1.msra.mxu0 %v161
      %196 = vmatprep.subr.mxu0 0.0
      %197 = vmatpush1.msra.mxu0 %v162
      %198 = vmatprep.subr.mxu0 0.0
      %199 = vmatpush1.msra.mxu0 %v163
      %200 = vmatprep.subr.mxu0 0.0
      %201 = vmatpush1.msra.mxu0 %v164
      %202 = vmatprep.subr.mxu0 0.0
      %203 = vmatpush1.msra.mxu0 %v165
      %204 = vmatprep.subr.mxu0 0.0
      %205 = vmatpush1.msra.mxu0 %v166
      %206 = vmatprep.subr.mxu0 0.0
      %207 = vmatpush1.msra.mxu0 %v167
      %208 = vmatprep.subr.mxu0 0.0
      %209 = vmatpush1.msra.mxu0 %v168
      %210 = vmatprep.subr.mxu0 0.0
      %211 = vmatpush1.msra.mxu0 %v169
      %212 = vmatprep.subr.mxu0 0.0
      %213 = vmatpush1.msra.mxu0 %v170
      %214 = vmatprep.subr.mxu0 0.0
      %215 = vmatpush1.msra.mxu0 %v171
      %216 = vmatprep.subr.mxu0 0.0
      %217 = vmatpush1.msra.mxu0 %v172
      %218 = vmatprep.subr.mxu0 0.0
      %219 = vmatpush1.msra.mxu0 %v173
      %220 = vmatprep.subr.mxu0 0.0
      %221 = vmatpush1.msra.mxu0 %v174
      %222 = vmatprep.subr.mxu0 0.0
      %223 = vmatpush1.msra.mxu0 %v175
      %224 = vmatprep.subr.mxu0 0.0
      %225 = vmatpush1.msra.mxu0 %v176
      %226 = vmatprep.subr.mxu0 0.0
      %227 = vmatpush1.msra.mxu0 %v177
      %228 = vmatprep.subr.mxu0 0.0
      %229 = vmatpush1.msra.mxu0 %v178
      %230 = vmatprep.subr.mxu0 0.0
      %231 = vmatpush1.msra.mxu0 %v179
      %232 = vmatprep.subr.mxu0 0.0
      %233 = vmatpush1.msra.mxu0 %v180
      %234 = vmatprep.subr.mxu0 0.0
      %235 = vmatpush1.msra.mxu0 %v181
      %236 = vmatprep.subr.mxu0 0.0
      %237 = vmatpush1.msra.mxu0 %v182
      %238 = vmatprep.subr.mxu0 0.0
      %239 = vmatpush1.msra.mxu0 %v183
      %240 = vmatprep.subr.mxu0 0.0
      %241 = vmatpush1.msra.mxu0 %v184
      %242 = vmatprep.subr.mxu0 0.0
      %243 = vmatpush1.msra.mxu0 %v185
      %244 = vmatprep.subr.mxu0 0.0
      %245 = vmatpush1.msra.mxu0 %v186
      %246 = vmatprep.subr.mxu0 0.0
      %247 = vmatpush1.msra.mxu0 %v187
      %248 = vmatprep.subr.mxu0 0.0
      %249 = vmatpush1.msra.mxu0 %v188
      %250 = vmatprep.subr.mxu0 0.0
      %251 = vmatpush1.msra.mxu0 %v189
      %252 = vmatprep.subr.mxu0 0.0
      %253 = vmatpush1.msra.mxu0 %v190
      %254 = vmatprep.subr.mxu0 0.0
      %255 = vmatpush1.msra.mxu0 %v191
      %256 = vmatprep.mubr.f32.mxu0 %v153
      %257 = vmatmul.mubr.f32.gmra.mrb[0].mxu0 %v152
      %v258 = vpop.f32.mrb[0].mxu0
      %v259 = vadd.f32 0.0, %v258
      %v260 = vpop.f32.mrb[0].mxu0
      %261 = vmatprep.mubr.f32.mxu0 %v155
      %262 = vmatmul.mubr.f32.gmra.mrb[0].mxu0 %v154
      %v263 = vpop.f32.mrb[0].mxu0
      %v264 = vadd.f32 0.0, %v263
      %v265 = vpop.f32.mrb[0].mxu0
      %266 = vmatprep.mubr.f32.mxu0 %v157
      %267 = vmatmul.mubr.f32.gmra.mrb[0].mxu0 %v156
      %v268 = vpop.f32.mrb[0].mxu0
      %v269 = vadd.f32 0.0, %v268
      %v270 = vpop.f32.mrb[0].mxu0
      %271 = vmatprep.mubr.f32.mxu0 %v159
      %272 = vmatmul.mubr.f32.gmra.mrb[0].mxu0 %v158
      %v273 = vpop.f32.mrb[0].mxu0
      %v274 = vadd.f32 0.0, %v273
      %v275 = vpop.f32.mrb[0].mxu0
      %276 = vdwg.mxu0
      %vm277 = vcmask 523264
      %278 = vst.msk [vmem:[%s150] sm:$0xff] %vm277, 0.0
      %279 = vst.msk [vmem:[%s150 + $0x20] sm:$0xff] %vm277, 0.0
      %280 = vst.msk [vmem:[%s150 + $0x18] sm:$0xff] %vm277, 0.0
      %281 = vst.msk [vmem:[%s150 + $0x38] sm:$0xff] %vm277, 0.0
      %282 = vst.msk [vmem:[%s150 + $0x8] sm:$0xff] %vm277, %v259
      %283 = vst.msk [vmem:[%s150 + $0x10] sm:$0xff] %vm277, %v264
      %284 = vst.msk [vmem:[%s150 + $0x28] sm:$0xff] %vm277, %v269
      %285 = vst.msk [vmem:[%s150 + $0x30] sm:$0xff] %vm277, %v274
      %s286 = smul.u32 2, %s13
      %p287 = scmp.lt.s32.totalorder %s286, 3
      %s288 = scalar_select %p287, %s286, 3
      %s289 = smul.addr %s288, 4
      %s290 = smul.addr %s289, 8
      %s291 = scalar_lea.vmem %s2, %s290
      // Predicated region
      $region29: #{lambda_layer_shortcut.1} parent=27 // pred_check
        %p292 = pneg %p78
      $region30: #{lambda_layer_shortcut.1} parent=27 // pred_check_branch
        %294 = sbr.rel (%p292) target = $region32
      $region31: #{lambda_layer_shortcut.1} parent=27 // pred_region
        %s295 = smul.u32 2, %s13
      $region32: #{lambda_layer_shortcut.1} parent=27 // pred_fallthru
        _
    $region28: #{lambda_layer_shortcut.1} parent=5 // pred_fallthru
      _
    %p296 = scmp.le.s32.totalorder 2, %s8
    // Predicated region
    $region33: #{lambda_layer_shortcut.1} parent=5 // pred_check
      %p297 = pneg %p296
    $region34: #{lambda_layer_shortcut.1} parent=5 // pred_check_branch
      %299 = sbr.rel (%p297) target = $region36
    $region35: #{lambda_layer_shortcut.1} parent=5 // pred_region
      %s300 = ssub.s32 %s8, 2
      // Predicated region
      $region37: #{lambda_layer_shortcut.1} parent=35 // pred_check
        %p301 = pneg %p84
      $region38: #{lambda_layer_shortcut.1} parent=35 // pred_check_branch
        %303 = sbr.rel (%p301) target = $region40
      $region39: #{lambda_layer_shortcut.1} parent=35 // pred_region
        %s304 = smul.u32 2, %s14
        %p305 = scmp.lt.s32.totalorder %s304, 3
        %s306 = scalar_select %p305, %s304, 3
        %s307 = smul.addr %s306, 4
        %s308 = smul.addr %s307, 8
        %s309 = scalar_lea.vmem %s2, %s308
      $region40: #{lambda_layer_shortcut.1} parent=35 // pred_fallthru
        _
    $region36: #{lambda_layer_shortcut.1} parent=5 // pred_fallthru
      _
  $region6: #{lambda_layer_shortcut.1} parent=0 // loop_footer
    %s12 = sadd.s32 1, %s8
  $region7: #{lambda_layer_shortcut.1} parent=0 // loop_footer_branch
    %7 = sbr.rel target = $region3
  $region8: #{lambda_layer_shortcut.1} parent=0 // loop_exit
    _

</llo_original>
